<compile_context>
chip_gen: v5e
topology: v5e:2x2
jax: 0.10.0
libtpu: 0.0.40
codegen_flags: <defaults>
</compile_context>

<pallas_src>
import functools

import jax
import jax.numpy as jnp
from jax.experimental import pallas as pl
from jax.experimental.pallas import tpu as pltpu


def _round_up(x, m):
    return (x + m - 1) // m * m


def _mlp_kernel(x_ref, w1_ref, b1_ref, w2_ref, b2_ref, o_ref):
    # Layer 1 on the MXU: (bm, D) bf16 @ (D, H) bf16 -> f32 accumulate.
    h = jnp.dot(x_ref[...], w1_ref[...], preferred_element_type=jnp.float32)
    h = jnp.maximum(h + b1_ref[...], 0.0)                       # (bm, H) f32

    # Dropout(p=0.3): identity (eval mode).

    # Layer 2 off the MXU: transpose once (XLU), broadcast-multiply by the W2 column,
    # reduce over the hidden (sublane) axis -> lane-dense (1, bm) row.
    ht = h.T                                                     # (H, bm)
    z = jnp.sum(ht * w2_ref[...], axis=0, keepdims=True)         # (1, bm)
    z = z + b2_ref[0, 0]                                         # SMEM scalar bias
    o_ref[...] = jax.nn.sigmoid(z).astype(o_ref.dtype)           # unmasked lane-dense store


@functools.partial(jax.jit, static_argnames=("block_m",))
def meta_learner_forward(x, w1, b1, w2, b2, *, block_m=512):
    B, D = x.shape
    H = w1.shape[1]

    # Batch tile: multiple of 128 (lane-dense output + full MXU rows), clamped to batch.
    bm = _round_up(min(block_m, _round_up(B, 128)), 128)
    b_pad = _round_up(B, bm)
    if b_pad != B:
        x = jnp.pad(x, ((0, b_pad - B), (0, 0)))
    grid = (b_pad // bm,)

    # bf16 operands for the dominant matmul (halves HBM traffic, native MXU path);
    # biases / second layer stay f32.
    x_bf16 = x.astype(jnp.bfloat16)
    w1_bf16 = w1.astype(jnp.bfloat16)
    b1_2d = b1.reshape(1, H).astype(jnp.float32)
    w2_2d = w2.reshape(H, 1).astype(jnp.float32)
    b2_2d = b2.reshape(1, 1).astype(jnp.float32)

    out = pl.pallas_call(
        _mlp_kernel,
        out_shape=jax.ShapeDtypeStruct((1, b_pad), jnp.float32),
        grid=grid,
        in_specs=[
            pl.BlockSpec((bm, D), lambda i: (i, 0)),             # x tile (streams)
            pl.BlockSpec((D, H), lambda i: (0, 0)),              # W1 (VMEM resident)
            pl.BlockSpec((1, H), lambda i: (0, 0)),              # b1 (VMEM resident)
            pl.BlockSpec((H, 1), lambda i: (0, 0)),              # W2 column (resident)
            pl.BlockSpec(memory_space=pltpu.MemorySpace.SMEM),   # b2 scalar in SMEM
        ],
        out_specs=pl.BlockSpec((1, bm), lambda i: (0, i)),        # lane-dense slab
        compiler_params=pltpu.CompilerParams(
            dimension_semantics=("parallel",),                    # megacore-shardable
        ),
    )(x_bf16, w1_bf16, b1_2d, w2_2d, b2_2d)

    # Back to (B, 1) in the wrapper (cheap layout plumbing on a tiny array).
    return out.reshape(b_pad, 1)[:B]


def init_params(key, input_dim=512, hidden_dim=128, dtype=jnp.float32):
    """Deterministic init mimicking PyTorch nn.Linear default U(-1/sqrt(fan_in), +)."""
    k1, k2, k3, k4 = jax.random.split(key, 4)
    bound1 = 1.0 / jnp.sqrt(input_dim)
    bound2 = 1.0 / jnp.sqrt(hidden_dim)
    w1 = jax.random.uniform(k1, (input_dim, hidden_dim), dtype, -bound1, bound1)
    b1 = jax.random.uniform(k2, (hidden_dim,), dtype, -bound1, bound1)
    w2 = jax.random.uniform(k3, (hidden_dim, 1), dtype, -bound2, bound2)
    b2 = jax.random.uniform(k4, (1,), dtype, -bound2, bound2)
    return w1, b1, w2, b2


if __name__ == "__main__":
    key = jax.random.PRNGKey(0)
    k_x, k_p = jax.random.split(key)

    B, INPUT_DIM, HIDDEN_DIM = 200, 512, 128   # ragged batch exercises padding path
    x = jax.random.normal(k_x, (B, INPUT_DIM), dtype=jnp.float32)
    w1, b1, w2, b2 = init_params(k_p, INPUT_DIM, HIDDEN_DIM)

    out = meta_learner_forward(x, w1, b1, w2, b2)
    out = jax.block_until_ready(out)

    # Reference in plain f32 JAX (eval-mode dropout == identity). bf16 inputs in the
    # kernel give ~1e-3-level post-sigmoid differences, so use a loose-but-meaningful tol.
    ref = jax.nn.sigmoid(jnp.maximum(x @ w1 + b1, 0.0) @ w2 + b2)
    assert out.shape == (B, 1)
    assert bool(jnp.all(jnp.isfinite(out)))
    assert jnp.allclose(out, ref, atol=2e-2), float(jnp.max(jnp.abs(out - ref)))

    print("KERNEL_OK")
</pallas_src>

<mosaic_0001>
module attributes {stable_mosaic.version = 11 : i64} {
  func.func @_mlp_kernel(%arg0: i32, %arg1: memref<256x512xbf16, #tpu.memory_space<vmem>>, %arg2: memref<512x128xbf16, #tpu.memory_space<vmem>>, %arg3: memref<1x128xf32, #tpu.memory_space<vmem>>, %arg4: memref<128x1xf32, #tpu.memory_space<vmem>>, %arg5: memref<1x1xf32, #tpu.memory_space<smem>>, %arg6: memref<1x256xf32, #tpu.memory_space<vmem>>) attributes {dimension_semantics = [#tpu.dimension_semantics<parallel>], iteration_bounds = array<i64: 1>, scalar_prefetch = 0 : i64, scratch_operands = 0 : i64, tpu.core_type = #tpu.core_type<tc>, window_params = [{transform_indices = @transform_0, window_bounds = array<i64: 256, 512>}, {pipeline_mode = #tpu.pipeline_mode<synchronous>, transform_indices = @transform_1, window_bounds = array<i64: 512, 128>}, {pipeline_mode = #tpu.pipeline_mode<synchronous>, transform_indices = @transform_2, window_bounds = array<i64: 1, 128>}, {pipeline_mode = #tpu.pipeline_mode<synchronous>, transform_indices = @transform_3, window_bounds = array<i64: 128, 1>}, {transform_indices = @transform_4, window_bounds = array<i64: 1, 1>}, {transform_indices = @transform_5, window_bounds = array<i64: 1, 256>}]} {
    %c0 = arith.constant 0 : index
    %c0_0 = arith.constant 0 : index
    %0 = vector.load %arg1[%c0, %c0_0] : memref<256x512xbf16, #tpu.memory_space<vmem>>, vector<256x512xbf16>
    %c0_1 = arith.constant 0 : index
    %c0_2 = arith.constant 0 : index
    %1 = vector.load %arg2[%c0_1, %c0_2] : memref<512x128xbf16, #tpu.memory_space<vmem>>, vector<512x128xbf16>
    %cst = arith.constant dense<0.000000e+00> : vector<256x128xf32>
    %2 = tpu.matmul %0, %1, %cst {dimension_numbers = #tpu.dot_dimension_numbers<[1], [0], [0], [1], [0, 0, 1, 1], [], []>} : vector<256x512xbf16>, vector<512x128xbf16>, vector<256x128xf32> -> vector<256x128xf32>
    %c0_3 = arith.constant 0 : index
    %c0_4 = arith.constant 0 : index
    %3 = vector.load %arg3[%c0_3, %c0_4] : memref<1x128xf32, #tpu.memory_space<vmem>>, vector<1x128xf32>
    %4 = vector.broadcast %3 : vector<1x128xf32> to vector<256x128xf32>
    %5 = arith.addf %2, %4 : vector<256x128xf32>
    %cst_5 = arith.constant 0.000000e+00 : f32
    %6 = vector.broadcast %cst_5 : f32 to vector<256x128xf32>
    %7 = arith.maximumf %5, %6 : vector<256x128xf32>
    %8 = tpu.transpose %7, [1, 0] : vector<256x128xf32> -> vector<128x256xf32>
    %c0_6 = arith.constant 0 : index
    %c0_7 = arith.constant 0 : index
    %9 = vector.load %arg4[%c0_6, %c0_7] : memref<128x1xf32, #tpu.memory_space<vmem>>, vector<128x1xf32>
    %10 = vector.broadcast %9 : vector<128x1xf32> to vector<128x256xf32>
    %11 = arith.mulf %8, %10 : vector<128x256xf32>
    %cst_8 = arith.constant dense<0.000000e+00> : vector<256xf32>
    %12 = vector.multi_reduction <add>, %11, %cst_8 [0] : vector<128x256xf32> to vector<256xf32>
    %13 = vector.shape_cast %12 : vector<256xf32> to vector<1x256xf32>
    %c0_9 = arith.constant 0 : index
    %c0_10 = arith.constant 0 : index
    %14 = memref.load %arg5[%c0_9, %c0_10] : memref<1x1xf32, #tpu.memory_space<smem>>
    %15 = vector.broadcast %14 : f32 to vector<1x256xf32>
    %16 = arith.addf %13, %15 : vector<1x256xf32>
    %17 = arith.negf %16 : vector<1x256xf32>
    %18 = math.exp %17 : vector<1x256xf32>
    %cst_11 = arith.constant 1.000000e+00 : f32
    %19 = vector.broadcast %cst_11 : f32 to vector<1x256xf32>
    %20 = arith.addf %19, %18 : vector<1x256xf32>
    %21 = arith.divf %19, %20 : vector<1x256xf32>
    %c0_12 = arith.constant 0 : index
    %c0_13 = arith.constant 0 : index
    %22 = vector.load %arg6[%c0_12, %c0_13] : memref<1x256xf32, #tpu.memory_space<vmem>>, vector<1x256xf32>
    tpu.vector_store %arg6[%c0_12, %c0_13], %21 {strides = array<i32>} : memref<1x256xf32, #tpu.memory_space<vmem>>, vector<1x256xf32>,
    return
  }
  func.func @transform_0(%arg0: i32) -> (i32, i32) {
    %c0_i32 = arith.constant 0 : i32
    %c0_i32_0 = arith.constant 0 : i32
    return %arg0, %c0_i32 : i32, i32
  }
  func.func @transform_1(%arg0: i32) -> (i32, i32) {
    %c0_i32 = arith.constant 0 : i32
    %c0_i32_0 = arith.constant 0 : i32
    %c0_i32_1 = arith.constant 0 : i32
    return %c0_i32, %c0_i32_0 : i32, i32
  }
  func.func @transform_2(%arg0: i32) -> (i32, i32) {
    %c0_i32 = arith.constant 0 : i32
    %c0_i32_0 = arith.constant 0 : i32
    %c0_i32_1 = arith.constant 0 : i32
    return %c0_i32, %c0_i32_0 : i32, i32
  }
  func.func @transform_3(%arg0: i32) -> (i32, i32) {
    %c0_i32 = arith.constant 0 : i32
    %c0_i32_0 = arith.constant 0 : i32
    %c0_i32_1 = arith.constant 0 : i32
    return %c0_i32, %c0_i32_0 : i32, i32
  }
  func.func @transform_4(%arg0: i32) -> (i32, i32) {
    %c0_i32 = arith.constant 0 : i32
    %c0_i32_0 = arith.constant 0 : i32
    %c0_i32_1 = arith.constant 0 : i32
    return %c0_i32, %c0_i32_0 : i32, i32
  }
  func.func @transform_5(%arg0: i32) -> (i32, i32) {
    %c0_i32 = arith.constant 0 : i32
    %c0_i32_0 = arith.constant 0 : i32
    return %c0_i32, %arg0 : i32, i32
  }
}

</mosaic_0001>

<llo_original>
// kernel: meta_learner_forward.1
$region0: #{meta_learner_forward.1}
  #allocation0 [shape = 'u32[]', space=smem, size = 0x4, offset = 0x4, fixed_abs, tag = 'smem constant byte address 0x4 - core index']
  #allocation1 [shape = 'u32[72,128]{1,0:T(1,128)}', space=vmem, size = 0x9000, scoped, tag = 'internal scratch']
  #allocation2 [shape = 'f32[1,1]{1,0:T(1,128)S(6)}', space=smem, size = 0x200, scoped, tag = 'scoped memory for meta_learner_forward.1']
  %s0 = inlined_call_operand.vmem [shape: bf16[256,512], index: 0, kind: input, shape index: {}]
  %s1 = inlined_call_operand.vmem [shape: bf16[512,128], index: 1, kind: input, shape index: {}]
  %s2 = inlined_call_operand.vmem [shape: f32[1,128], index: 2, kind: input, shape index: {}]
  %s3 = inlined_call_operand.vmem [shape: f32[128,1], index: 3, kind: input, shape index: {}]
  %s4 = inlined_call_operand.<no memory space> [shape: f32[1,1], index: 4, kind: input, shape index: {}]
  %s5 = inlined_call_operand.vmem [shape: f32[1,256], index: 5, kind: output, shape index: {}]
  %s6 = sld [smem:[#allocation0]]
  $region30: #{meta_learner_forward.1} parent=0
    _
  %s8 = ssub.s32 1, %s6
  %s9 = scalar_select 0, %s8, %s6
  %10 = sst [smem:[#allocation2]] %s4
  // Predicated region
  $region2: #{meta_learner_forward.1} parent=0 // pred_check
    _
  $region3: #{meta_learner_forward.1} parent=0 // pred_check_branch
    %12 = sbr.rel (0) target = $region5
  $region4: #{meta_learner_forward.1} parent=0 // pred_region
    _
  $region5: #{meta_learner_forward.1} parent=0 // pred_fallthru
    _
  // Predicated region
  $region6: #{meta_learner_forward.1} parent=0 // pred_check
    _
  $region7: #{meta_learner_forward.1} parent=0 // pred_check_branch
    %14 = sbr.rel (0) target = $region9
  $region8: #{meta_learner_forward.1} parent=0 // pred_region
    _
  $region9: #{meta_learner_forward.1} parent=0 // pred_fallthru
    _
  // Predicated region
  $region10: #{meta_learner_forward.1} parent=0 // pred_check
    _
  $region11: #{meta_learner_forward.1} parent=0 // pred_check_branch
    %16 = sbr.rel (0) target = $region13
  $region12: #{meta_learner_forward.1} parent=0 // pred_region
    _
  $region13: #{meta_learner_forward.1} parent=0 // pred_fallthru
    _
  // Predicated region
  $region14: #{meta_learner_forward.1} parent=0 // pred_check
    _
  $region15: #{meta_learner_forward.1} parent=0 // pred_check_branch
    %18 = sbr.rel (0) target = $region17
  $region16: #{meta_learner_forward.1} parent=0 // pred_region
    _
  $region17: #{meta_learner_forward.1} parent=0 // pred_fallthru
    _
  // Predicated region
  $region18: #{meta_learner_forward.1} parent=0 // pred_check
    _
  $region19: #{meta_learner_forward.1} parent=0 // pred_check_branch
    %20 = sbr.rel (0) target = $region21
  $region20: #{meta_learner_forward.1} parent=0 // pred_region
    _
  $region21: #{meta_learner_forward.1} parent=0 // pred_fallthru
    _
  %v21 = vld [vmem:[%s0] sm:$0xff]
  %v22 = vld [vmem:[%s0 + $0x8] sm:$0xff]
  %v23 = vld [vmem:[%s0 + $0x10] sm:$0xff]
  %v24 = vld [vmem:[%s0 + $0x18] sm:$0xff]
  %v25 = vld [vmem:[%s0 + $0x20] sm:$0xff]
  %v26 = vld [vmem:[%s0 + $0x28] sm:$0xff]
  %v27 = vld [vmem:[%s0 + $0x30] sm:$0xff]
  %v28 = vld [vmem:[%s0 + $0x38] sm:$0xff]
  %v29 = vld [vmem:[%s0 + $0x40] sm:$0xff]
  %v30 = vld [vmem:[%s0 + $0x48] sm:$0xff]
  %v31 = vld [vmem:[%s0 + $0x50] sm:$0xff]
  %v32 = vld [vmem:[%s0 + $0x58] sm:$0xff]
  %v33 = vld [vmem:[%s0 + $0x60] sm:$0xff]
  %v34 = vld [vmem:[%s0 + $0x68] sm:$0xff]
  %v35 = vld [vmem:[%s0 + $0x70] sm:$0xff]
  %v36 = vld [vmem:[%s0 + $0x78] sm:$0xff]
  %v37 = vld [vmem:[%s0 + $0x80] sm:$0xff]
  %v38 = vld [vmem:[%s0 + $0x88] sm:$0xff]
  %v39 = vld [vmem:[%s0 + $0x90] sm:$0xff]
  %v40 = vld [vmem:[%s0 + $0x98] sm:$0xff]
  %v41 = vld [vmem:[%s0 + $0xa0] sm:$0xff]
  %v42 = vld [vmem:[%s0 + $0xa8] sm:$0xff]
  %v43 = vld [vmem:[%s0 + $0xb0] sm:$0xff]
  %v44 = vld [vmem:[%s0 + $0xb8] sm:$0xff]
  %v45 = vld [vmem:[%s0 + $0xc0] sm:$0xff]
  %v46 = vld [vmem:[%s0 + $0xc8] sm:$0xff]
  %v47 = vld [vmem:[%s0 + $0xd0] sm:$0xff]
  %v48 = vld [vmem:[%s0 + $0xd8] sm:$0xff]
  %v49 = vld [vmem:[%s0 + $0xe0] sm:$0xff]
  %v50 = vld [vmem:[%s0 + $0xe8] sm:$0xff]
  %v51 = vld [vmem:[%s0 + $0xf0] sm:$0xff]
  %v52 = vld [vmem:[%s0 + $0xf8] sm:$0xff]
  %v53 = vld [vmem:[%s0 + $0x100] sm:$0xff]
  %v54 = vld [vmem:[%s0 + $0x108] sm:$0xff]
  %v55 = vld [vmem:[%s0 + $0x110] sm:$0xff]
  %v56 = vld [vmem:[%s0 + $0x118] sm:$0xff]
  %v57 = vld [vmem:[%s0 + $0x120] sm:$0xff]
  %v58 = vld [vmem:[%s0 + $0x128] sm:$0xff]
  %v59 = vld [vmem:[%s0 + $0x130] sm:$0xff]
  %v60 = vld [vmem:[%s0 + $0x138] sm:$0xff]
  %v61 = vld [vmem:[%s0 + $0x140] sm:$0xff]
  %v62 = vld [vmem:[%s0 + $0x148] sm:$0xff]
  %v63 = vld [vmem:[%s0 + $0x150] sm:$0xff]
  %v64 = vld [vmem:[%s0 + $0x158] sm:$0xff]
  %v65 = vld [vmem:[%s0 + $0x160] sm:$0xff]
  %v66 = vld [vmem:[%s0 + $0x168] sm:$0xff]
  %v67 = vld [vmem:[%s0 + $0x170] sm:$0xff]
  %v68 = vld [vmem:[%s0 + $0x178] sm:$0xff]
  %v69 = vld [vmem:[%s0 + $0x180] sm:$0xff]
  %v70 = vld [vmem:[%s0 + $0x188] sm:$0xff]
  %v71 = vld [vmem:[%s0 + $0x190] sm:$0xff]
  %v72 = vld [vmem:[%s0 + $0x198] sm:$0xff]
  %v73 = vld [vmem:[%s0 + $0x1a0] sm:$0xff]
  %v74 = vld [vmem:[%s0 + $0x1a8] sm:$0xff]
  %v75 = vld [vmem:[%s0 + $0x1b0] sm:$0xff]
  %v76 = vld [vmem:[%s0 + $0x1b8] sm:$0xff]
  %v77 = vld [vmem:[%s0 + $0x1c0] sm:$0xff]
  %v78 = vld [vmem:[%s0 + $0x1c8] sm:$0xff]
  %v79 = vld [vmem:[%s0 + $0x1d0] sm:$0xff]
  %v80 = vld [vmem:[%s0 + $0x1d8] sm:$0xff]
  %v81 = vld [vmem:[%s0 + $0x1e0] sm:$0xff]
  %v82 = vld [vmem:[%s0 + $0x1e8] sm:$0xff]
  %v83 = vld [vmem:[%s0 + $0x1f0] sm:$0xff]
  %v84 = vld [vmem:[%s0 + $0x1f8] sm:$0xff]
  %v85 = vld [vmem:[%s1] sm:$0xf]
  %v86 = vld [vmem:[%s1 + $0x4] sm:$0xf]
  %v87 = vld [vmem:[%s1 + $0x8] sm:$0xf]
  %v88 = vld [vmem:[%s1 + $0xc] sm:$0xf]
  %v89 = vld [vmem:[%s1 + $0x10] sm:$0xf]
  %v90 = vld [vmem:[%s1 + $0x14] sm:$0xf]
  %v91 = vld [vmem:[%s1 + $0x18] sm:$0xf]
  %v92 = vld [vmem:[%s1 + $0x1c] sm:$0xf]
  %v93 = vld [vmem:[%s1 + $0x20] sm:$0xf]
  %v94 = vld [vmem:[%s1 + $0x24] sm:$0xf]
  %v95 = vld [vmem:[%s1 + $0x28] sm:$0xf]
  %v96 = vld [vmem:[%s1 + $0x2c] sm:$0xf]
  %v97 = vld [vmem:[%s1 + $0x30] sm:$0xf]
  %v98 = vld [vmem:[%s1 + $0x34] sm:$0xf]
  %v99 = vld [vmem:[%s1 + $0x38] sm:$0xf]
  %v100 = vld [vmem:[%s1 + $0x3c] sm:$0xf]
  %v101 = vld [vmem:[%s1 + $0x40] sm:$0xf]
  %v102 = vld [vmem:[%s1 + $0x44] sm:$0xf]
  %v103 = vld [vmem:[%s1 + $0x48] sm:$0xf]
  %v104 = vld [vmem:[%s1 + $0x4c] sm:$0xf]
  %v105 = vld [vmem:[%s1 + $0x50] sm:$0xf]
  %v106 = vld [vmem:[%s1 + $0x54] sm:$0xf]
  %v107 = vld [vmem:[%s1 + $0x58] sm:$0xf]
  %v108 = vld [vmem:[%s1 + $0x5c] sm:$0xf]
  %v109 = vld [vmem:[%s1 + $0x60] sm:$0xf]
  %v110 = vld [vmem:[%s1 + $0x64] sm:$0xf]
  %v111 = vld [vmem:[%s1 + $0x68] sm:$0xf]
  %v112 = vld [vmem:[%s1 + $0x6c] sm:$0xf]
  %v113 = vld [vmem:[%s1 + $0x70] sm:$0xf]
  %v114 = vld [vmem:[%s1 + $0x74] sm:$0xf]
  %v115 = vld [vmem:[%s1 + $0x78] sm:$0xf]
  %v116 = vld [vmem:[%s1 + $0x7c] sm:$0xf]
  %v117 = vld [vmem:[%s1 + $0x80] sm:$0xf]
  %v118 = vld [vmem:[%s1 + $0x84] sm:$0xf]
  %v119 = vld [vmem:[%s1 + $0x88] sm:$0xf]
  %v120 = vld [vmem:[%s1 + $0x8c] sm:$0xf]
  %v121 = vld [vmem:[%s1 + $0x90] sm:$0xf]
  %v122 = vld [vmem:[%s1 + $0x94] sm:$0xf]
  %v123 = vld [vmem:[%s1 + $0x98] sm:$0xf]
  %v124 = vld [vmem:[%s1 + $0x9c] sm:$0xf]
  %v125 = vld [vmem:[%s1 + $0xa0] sm:$0xf]
  %v126 = vld [vmem:[%s1 + $0xa4] sm:$0xf]
  %v127 = vld [vmem:[%s1 + $0xa8] sm:$0xf]
  %v128 = vld [vmem:[%s1 + $0xac] sm:$0xf]
  %v129 = vld [vmem:[%s1 + $0xb0] sm:$0xf]
  %v130 = vld [vmem:[%s1 + $0xb4] sm:$0xf]
  %v131 = vld [vmem:[%s1 + $0xb8] sm:$0xf]
  %v132 = vld [vmem:[%s1 + $0xbc] sm:$0xf]
  %v133 = vld [vmem:[%s1 + $0xc0] sm:$0xf]
  %v134 = vld [vmem:[%s1 + $0xc4] sm:$0xf]
  %v135 = vld [vmem:[%s1 + $0xc8] sm:$0xf]
  %v136 = vld [vmem:[%s1 + $0xcc] sm:$0xf]
  %v137 = vld [vmem:[%s1 + $0xd0] sm:$0xf]
  %v138 = vld [vmem:[%s1 + $0xd4] sm:$0xf]
  %v139 = vld [vmem:[%s1 + $0xd8] sm:$0xf]
  %v140 = vld [vmem:[%s1 + $0xdc] sm:$0xf]
  %v141 = vld [vmem:[%s1 + $0xe0] sm:$0xf]
  %v142 = vld [vmem:[%s1 + $0xe4] sm:$0xf]
  %v143 = vld [vmem:[%s1 + $0xe8] sm:$0xf]
  %v144 = vld [vmem:[%s1 + $0xec] sm:$0xf]
  %v145 = vld [vmem:[%s1 + $0xf0] sm:$0xf]
  %v146 = vld [vmem:[%s1 + $0xf4] sm:$0xf]
  %v147 = vld [vmem:[%s1 + $0xf8] sm:$0xf]
  %v148 = vld [vmem:[%s1 + $0xfc] sm:$0xf]
  %v149 = vld [vmem:[%s2] sm:$0x1]
  %v151 = vperm.slane %v149, 0
  %v217 = vunpack.c.l.b16 %v21
  %v218 = vunpack.c.h.b16 %v21
  %v219 = vunpack.c.l.b16 %v22
  %v220 = vunpack.c.h.b16 %v22
  %v221 = vunpack.c.l.b16 %v23
  %v222 = vunpack.c.h.b16 %v23
  %v223 = vunpack.c.l.b16 %v24
  %v224 = vunpack.c.h.b16 %v24
  %v225 = vunpack.c.l.b16 %v25
  %v226 = vunpack.c.h.b16 %v25
  %v227 = vunpack.c.l.b16 %v26
  %v228 = vunpack.c.h.b16 %v26
  %v229 = vunpack.c.l.b16 %v27
  %v230 = vunpack.c.h.b16 %v27
  %v231 = vunpack.c.l.b16 %v28
  %v232 = vunpack.c.h.b16 %v28
  %v233 = vunpack.c.l.b16 %v29
  %v234 = vunpack.c.h.b16 %v29
  %v235 = vunpack.c.l.b16 %v30
  %v236 = vunpack.c.h.b16 %v30
  %v237 = vunpack.c.l.b16 %v31
  %v238 = vunpack.c.h.b16 %v31
  %v239 = vunpack.c.l.b16 %v32
  %v240 = vunpack.c.h.b16 %v32
  %v241 = vunpack.c.l.b16 %v33
  %v242 = vunpack.c.h.b16 %v33
  %v243 = vunpack.c.l.b16 %v34
  %v244 = vunpack.c.h.b16 %v34
  %v245 = vunpack.c.l.b16 %v35
  %v246 = vunpack.c.h.b16 %v35
  %v247 = vunpack.c.l.b16 %v36
  %v248 = vunpack.c.h.b16 %v36
  %v249 = vunpack.c.l.b16 %v37
  %v250 = vunpack.c.h.b16 %v37
  %v251 = vunpack.c.l.b16 %v38
  %v252 = vunpack.c.h.b16 %v38
  %v253 = vunpack.c.l.b16 %v39
  %v254 = vunpack.c.h.b16 %v39
  %v255 = vunpack.c.l.b16 %v40
  %v256 = vunpack.c.h.b16 %v40
  %v257 = vunpack.c.l.b16 %v41
  %v258 = vunpack.c.h.b16 %v41
  %v259 = vunpack.c.l.b16 %v42
  %v260 = vunpack.c.h.b16 %v42
  %v261 = vunpack.c.l.b16 %v43
  %v262 = vunpack.c.h.b16 %v43
  %v263 = vunpack.c.l.b16 %v44
  %v264 = vunpack.c.h.b16 %v44
  %v265 = vunpack.c.l.b16 %v45
  %v266 = vunpack.c.h.b16 %v45
  %v267 = vunpack.c.l.b16 %v46
  %v268 = vunpack.c.h.b16 %v46
  %v269 = vunpack.c.l.b16 %v47
  %v270 = vunpack.c.h.b16 %v47
  %v271 = vunpack.c.l.b16 %v48
  %v272 = vunpack.c.h.b16 %v48
  %v273 = vunpack.c.l.b16 %v49
  %v274 = vunpack.c.h.b16 %v49
  %v275 = vunpack.c.l.b16 %v50
  %v276 = vunpack.c.h.b16 %v50
  %v277 = vunpack.c.l.b16 %v51
  %v278 = vunpack.c.h.b16 %v51
  %v279 = vunpack.c.l.b16 %v52
  %v280 = vunpack.c.h.b16 %v52
  %v281 = vunpack.c.l.b16 %v53
  %v282 = vunpack.c.h.b16 %v53
  %v283 = vunpack.c.l.b16 %v54
  %v284 = vunpack.c.h.b16 %v54
  %v285 = vunpack.c.l.b16 %v55
  %v286 = vunpack.c.h.b16 %v55
  %v287 = vunpack.c.l.b16 %v56
  %v288 = vunpack.c.h.b16 %v56
  %v289 = vunpack.c.l.b16 %v57
  %v290 = vunpack.c.h.b16 %v57
  %v291 = vunpack.c.l.b16 %v58
  %v292 = vunpack.c.h.b16 %v58
  %v293 = vunpack.c.l.b16 %v59
  %v294 = vunpack.c.h.b16 %v59
  %v295 = vunpack.c.l.b16 %v60
  %v296 = vunpack.c.h.b16 %v60
  %v297 = vunpack.c.l.b16 %v61
  %v298 = vunpack.c.h.b16 %v61
  %v299 = vunpack.c.l.b16 %v62
  %v300 = vunpack.c.h.b16 %v62
  %v301 = vunpack.c.l.b16 %v63
  %v302 = vunpack.c.h.b16 %v63
  %v303 = vunpack.c.l.b16 %v64
  %v304 = vunpack.c.h.b16 %v64
  %v305 = vunpack.c.l.b16 %v65
  %v306 = vunpack.c.h.b16 %v65
  %v307 = vunpack.c.l.b16 %v66
  %v308 = vunpack.c.h.b16 %v66
  %v309 = vunpack.c.l.b16 %v67
  %v310 = vunpack.c.h.b16 %v67
  %v311 = vunpack.c.l.b16 %v68
  %v312 = vunpack.c.h.b16 %v68
  %v313 = vunpack.c.l.b16 %v69
  %v314 = vunpack.c.h.b16 %v69
  %v315 = vunpack.c.l.b16 %v70
  %v316 = vunpack.c.h.b16 %v70
  %v317 = vunpack.c.l.b16 %v71
  %v318 = vunpack.c.h.b16 %v71
  %v319 = vunpack.c.l.b16 %v72
  %v320 = vunpack.c.h.b16 %v72
  %v321 = vunpack.c.l.b16 %v73
  %v322 = vunpack.c.h.b16 %v73
  %v323 = vunpack.c.l.b16 %v74
  %v324 = vunpack.c.h.b16 %v74
  %v325 = vunpack.c.l.b16 %v75
  %v326 = vunpack.c.h.b16 %v75
  %v327 = vunpack.c.l.b16 %v76
  %v328 = vunpack.c.h.b16 %v76
  %v329 = vunpack.c.l.b16 %v77
  %v330 = vunpack.c.h.b16 %v77
  %v331 = vunpack.c.l.b16 %v78
  %v332 = vunpack.c.h.b16 %v78
  %v333 = vunpack.c.l.b16 %v79
  %v334 = vunpack.c.h.b16 %v79
  %v335 = vunpack.c.l.b16 %v80
  %v336 = vunpack.c.h.b16 %v80
  %v337 = vunpack.c.l.b16 %v81
  %v338 = vunpack.c.h.b16 %v81
  %v339 = vunpack.c.l.b16 %v82
  %v340 = vunpack.c.h.b16 %v82
  %v341 = vunpack.c.l.b16 %v83
  %v342 = vunpack.c.h.b16 %v83
  %v343 = vunpack.c.l.b16 %v84
  %v344 = vunpack.c.h.b16 %v84
  %v345 = vpack.c.b16 %v221, %v217
  %v346 = vpack.c.b16 %v222, %v218
  %v347 = vpack.c.b16 %v223, %v219
  %v348 = vpack.c.b16 %v224, %v220
  %v349 = vpack.c.b16 %v229, %v225
  %v350 = vpack.c.b16 %v230, %v226
  %v351 = vpack.c.b16 %v231, %v227
  %v352 = vpack.c.b16 %v232, %v228
  %v353 = vpack.c.b16 %v237, %v233
  %v354 = vpack.c.b16 %v238, %v234
  %v355 = vpack.c.b16 %v239, %v235
  %v356 = vpack.c.b16 %v240, %v236
  %v357 = vpack.c.b16 %v245, %v241
  %v358 = vpack.c.b16 %v246, %v242
  %v359 = vpack.c.b16 %v247, %v243
  %v360 = vpack.c.b16 %v248, %v244
  %v361 = vpack.c.b16 %v253, %v249
  %v362 = vpack.c.b16 %v254, %v250
  %v363 = vpack.c.b16 %v255, %v251
  %v364 = vpack.c.b16 %v256, %v252
  %v365 = vpack.c.b16 %v261, %v257
  %v366 = vpack.c.b16 %v262, %v258
  %v367 = vpack.c.b16 %v263, %v259
  %v368 = vpack.c.b16 %v264, %v260
  %v369 = vpack.c.b16 %v269, %v265
  %v370 = vpack.c.b16 %v270, %v266
  %v371 = vpack.c.b16 %v271, %v267
  %v372 = vpack.c.b16 %v272, %v268
  %v373 = vpack.c.b16 %v277, %v273
  %v374 = vpack.c.b16 %v278, %v274
  %v375 = vpack.c.b16 %v279, %v275
  %v376 = vpack.c.b16 %v280, %v276
  %v377 = vpack.c.b16 %v285, %v281
  %v378 = vpack.c.b16 %v286, %v282
  %v379 = vpack.c.b16 %v287, %v283
  %v380 = vpack.c.b16 %v288, %v284
  %v381 = vpack.c.b16 %v293, %v289
  %v382 = vpack.c.b16 %v294, %v290
  %v383 = vpack.c.b16 %v295, %v291
  %v384 = vpack.c.b16 %v296, %v292
  %v385 = vpack.c.b16 %v301, %v297
  %v386 = vpack.c.b16 %v302, %v298
  %v387 = vpack.c.b16 %v303, %v299
  %v388 = vpack.c.b16 %v304, %v300
  %v389 = vpack.c.b16 %v309, %v305
  %v390 = vpack.c.b16 %v310, %v306
  %v391 = vpack.c.b16 %v311, %v307
  %v392 = vpack.c.b16 %v312, %v308
  %v393 = vpack.c.b16 %v317, %v313
  %v394 = vpack.c.b16 %v318, %v314
  %v395 = vpack.c.b16 %v319, %v315
  %v396 = vpack.c.b16 %v320, %v316
  %v397 = vpack.c.b16 %v325, %v321
  %v398 = vpack.c.b16 %v326, %v322
  %v399 = vpack.c.b16 %v327, %v323
  %v400 = vpack.c.b16 %v328, %v324
  %v401 = vpack.c.b16 %v333, %v329
  %v402 = vpack.c.b16 %v334, %v330
  %v403 = vpack.c.b16 %v335, %v331
  %v404 = vpack.c.b16 %v336, %v332
  %v405 = vpack.c.b16 %v341, %v337
  %v406 = vpack.c.b16 %v342, %v338
  %v407 = vpack.c.b16 %v343, %v339
  %v408 = vpack.c.b16 %v344, %v340
  %v537 = vunpack.c.l.b16 %v85
  %v538 = vunpack.c.l.b16 %v86
  %v539 = vunpack.c.l.b16 %v87
  %v540 = vunpack.c.l.b16 %v88
  %v541 = vunpack.c.l.b16 %v89
  %v542 = vunpack.c.l.b16 %v90
  %v543 = vunpack.c.l.b16 %v91
  %v544 = vunpack.c.l.b16 %v92
  %v545 = vunpack.c.l.b16 %v93
  %v546 = vunpack.c.l.b16 %v94
  %v547 = vunpack.c.l.b16 %v95
  %v548 = vunpack.c.l.b16 %v96
  %v549 = vunpack.c.l.b16 %v97
  %v550 = vunpack.c.l.b16 %v98
  %v551 = vunpack.c.l.b16 %v99
  %v552 = vunpack.c.l.b16 %v100
  %v553 = vunpack.c.l.b16 %v101
  %v554 = vunpack.c.l.b16 %v102
  %v555 = vunpack.c.l.b16 %v103
  %v556 = vunpack.c.l.b16 %v104
  %v557 = vunpack.c.l.b16 %v105
  %v558 = vunpack.c.l.b16 %v106
  %v559 = vunpack.c.l.b16 %v107
  %v560 = vunpack.c.l.b16 %v108
  %v561 = vunpack.c.l.b16 %v109
  %v562 = vunpack.c.l.b16 %v110
  %v563 = vunpack.c.l.b16 %v111
  %v564 = vunpack.c.l.b16 %v112
  %v565 = vunpack.c.l.b16 %v113
  %v566 = vunpack.c.l.b16 %v114
  %v567 = vunpack.c.l.b16 %v115
  %v568 = vunpack.c.l.b16 %v116
  %v569 = vunpack.c.l.b16 %v117
  %v570 = vunpack.c.l.b16 %v118
  %v571 = vunpack.c.l.b16 %v119
  %v572 = vunpack.c.l.b16 %v120
  %v573 = vunpack.c.l.b16 %v121
  %v574 = vunpack.c.l.b16 %v122
  %v575 = vunpack.c.l.b16 %v123
  %v576 = vunpack.c.l.b16 %v124
  %v577 = vunpack.c.l.b16 %v125
  %v578 = vunpack.c.l.b16 %v126
  %v579 = vunpack.c.l.b16 %v127
  %v580 = vunpack.c.l.b16 %v128
  %v581 = vunpack.c.l.b16 %v129
  %v582 = vunpack.c.l.b16 %v130
  %v583 = vunpack.c.l.b16 %v131
  %v584 = vunpack.c.l.b16 %v132
  %v585 = vunpack.c.l.b16 %v133
  %v586 = vunpack.c.l.b16 %v134
  %v587 = vunpack.c.l.b16 %v135
  %v588 = vunpack.c.l.b16 %v136
  %v589 = vunpack.c.l.b16 %v137
  %v590 = vunpack.c.l.b16 %v138
  %v591 = vunpack.c.l.b16 %v139
  %v592 = vunpack.c.l.b16 %v140
  %v593 = vunpack.c.l.b16 %v141
  %v594 = vunpack.c.l.b16 %v142
  %v595 = vunpack.c.l.b16 %v143
  %v596 = vunpack.c.l.b16 %v144
  %v597 = vunpack.c.l.b16 %v145
  %v598 = vunpack.c.l.b16 %v146
  %v599 = vunpack.c.l.b16 %v147
  %v600 = vunpack.c.l.b16 %v148
  %v601 = vpack.c.b16 %v538, %v537
  %v602 = vpack.c.b16 %v540, %v539
  %v603 = vpack.c.b16 %v542, %v541
  %v604 = vpack.c.b16 %v544, %v543
  %v605 = vpack.c.b16 %v546, %v545
  %v606 = vpack.c.b16 %v548, %v547
  %v607 = vpack.c.b16 %v550, %v549
  %v608 = vpack.c.b16 %v552, %v551
  %v609 = vpack.c.b16 %v554, %v553
  %v610 = vpack.c.b16 %v556, %v555
  %v611 = vpack.c.b16 %v558, %v557
  %v612 = vpack.c.b16 %v560, %v559
  %v613 = vpack.c.b16 %v562, %v561
  %v614 = vpack.c.b16 %v564, %v563
  %v615 = vpack.c.b16 %v566, %v565
  %v616 = vpack.c.b16 %v568, %v567
  %v617 = vpack.c.b16 %v570, %v569
  %v618 = vpack.c.b16 %v572, %v571
  %v619 = vpack.c.b16 %v574, %v573
  %v620 = vpack.c.b16 %v576, %v575
  %v621 = vpack.c.b16 %v578, %v577
  %v622 = vpack.c.b16 %v580, %v579
  %v623 = vpack.c.b16 %v582, %v581
  %v624 = vpack.c.b16 %v584, %v583
  %v625 = vpack.c.b16 %v586, %v585
  %v626 = vpack.c.b16 %v588, %v587
  %v627 = vpack.c.b16 %v590, %v589
  %v628 = vpack.c.b16 %v592, %v591
  %v629 = vpack.c.b16 %v594, %v593
  %v630 = vpack.c.b16 %v596, %v595
  %v631 = vpack.c.b16 %v598, %v597
  %v632 = vpack.c.b16 %v600, %v599
  %665 = vmatpush.bf16.msra.mxu0 %v608
  %666 = vmatpush.bf16.msra.mxu0 %v607
  %667 = vmatpush.bf16.msra.mxu0 %v606
  %668 = vmatpush.bf16.msra.mxu0 %v605
  %669 = vmatpush.bf16.msra.mxu0 %v604
  %670 = vmatpush.bf16.msra.mxu0 %v603
  %671 = vmatpush.bf16.msra.mxu0 %v602
  %672 = vmatpush.bf16.msra.mxu0 %v601
  %673 = vmatmul.bf16.gmra.mxu0 %v345
  %v674 = vpop.f32.mrf.mxu0
  %v675 = vadd.f32 %v151, %v674
  %v676 = vpop.f32.mrf.mxu0
  %v677 = vadd.f32 %v151, %v676
  %678 = vmatmul.bf16.gmra.mxu0 %v349
  %v679 = vpop.f32.mrf.mxu0
  %v680 = vadd.f32 %v151, %v679
  %v681 = vpop.f32.mrf.mxu0
  %v682 = vadd.f32 %v151, %v681
  %683 = vmatmul.bf16.gmra.mxu0 %v353
  %v684 = vpop.f32.mrf.mxu0
  %v685 = vadd.f32 %v151, %v684
  %v686 = vpop.f32.mrf.mxu0
  %v687 = vadd.f32 %v151, %v686
  %688 = vmatmul.bf16.gmra.mxu0 %v357
  %v689 = vpop.f32.mrf.mxu0
  %v690 = vadd.f32 %v151, %v689
  %v691 = vpop.f32.mrf.mxu0
  %v692 = vadd.f32 %v151, %v691
  %693 = vmatmul.bf16.gmra.mxu0 %v361
  %v694 = vpop.f32.mrf.mxu0
  %v695 = vadd.f32 %v151, %v694
  %v696 = vpop.f32.mrf.mxu0
  %v697 = vadd.f32 %v151, %v696
  %698 = vmatmul.bf16.gmra.mxu0 %v365
  %v699 = vpop.f32.mrf.mxu0
  %v700 = vadd.f32 %v151, %v699
  %v701 = vpop.f32.mrf.mxu0
  %v702 = vadd.f32 %v151, %v701
  %703 = vmatmul.bf16.gmra.mxu0 %v369
  %v704 = vpop.f32.mrf.mxu0
  %v705 = vadd.f32 %v151, %v704
  %v706 = vpop.f32.mrf.mxu0
  %v707 = vadd.f32 %v151, %v706
  %708 = vmatmul.bf16.gmra.mxu0 %v373
  %v709 = vpop.f32.mrf.mxu0
  %v710 = vadd.f32 %v151, %v709
  %v711 = vpop.f32.mrf.mxu0
  %v712 = vadd.f32 %v151, %v711
  %713 = vmatmul.bf16.gmra.mxu0 %v377
  %v714 = vpop.f32.mrf.mxu0
  %v715 = vadd.f32 %v151, %v714
  %v716 = vpop.f32.mrf.mxu0
  %v717 = vadd.f32 %v151, %v716
  %718 = vmatmul.bf16.gmra.mxu0 %v381
  %v719 = vpop.f32.mrf.mxu0
  %v720 = vadd.f32 %v151, %v719
  %v721 = vpop.f32.mrf.mxu0
  %v722 = vadd.f32 %v151, %v721
  %723 = vmatmul.bf16.gmra.mxu0 %v385
  %v724 = vpop.f32.mrf.mxu0
  %v725 = vadd.f32 %v151, %v724
  %v726 = vpop.f32.mrf.mxu0
  %v727 = vadd.f32 %v151, %v726
  %728 = vmatmul.bf16.gmra.mxu0 %v389
  %v729 = vpop.f32.mrf.mxu0
  %v730 = vadd.f32 %v151, %v729
  %v731 = vpop.f32.mrf.mxu0
  %v732 = vadd.f32 %v151, %v731
  %733 = vmatmul.bf16.gmra.mxu0 %v393
  %v734 = vpop.f32.mrf.mxu0
  %v735 = vadd.f32 %v151, %v734
  %v736 = vpop.f32.mrf.mxu0
  %v737 = vadd.f32 %v151, %v736
  %738 = vmatmul.bf16.gmra.mxu0 %v397
  %v739 = vpop.f32.mrf.mxu0
  %v740 = vadd.f32 %v151, %v739
  %v741 = vpop.f32.mrf.mxu0
  %v742 = vadd.f32 %v151, %v741
  %743 = vmatmul.bf16.gmra.mxu0 %v401
  %v744 = vpop.f32.mrf.mxu0
  %v745 = vadd.f32 %v151, %v744
  %v746 = vpop.f32.mrf.mxu0
  %v747 = vadd.f32 %v151, %v746
  %748 = vmatmul.bf16.gmra.mxu0 %v405
  %v749 = vpop.f32.mrf.mxu0
  %v750 = vadd.f32 %v151, %v749
  %v751 = vpop.f32.mrf.mxu0
  %v752 = vadd.f32 %v151, %v751
  %753 = vdwg.mxu0
  %754 = vmatpush.bf16.msra.mxu0 %v616
  %755 = vmatpush.bf16.msra.mxu0 %v615
  %756 = vmatpush.bf16.msra.mxu0 %v614
  %757 = vmatpush.bf16.msra.mxu0 %v613
  %758 = vmatpush.bf16.msra.mxu0 %v612
  %759 = vmatpush.bf16.msra.mxu0 %v611
  %760 = vmatpush.bf16.msra.mxu0 %v610
  %761 = vmatpush.bf16.msra.mxu0 %v609
  %762 = vmatmul.bf16.gmra.mxu0 %v346
  %v763 = vpop.f32.mrf.mxu0
  %v764 = vadd.f32 %v675, %v763
  %v765 = vpop.f32.mrf.mxu0
  %v766 = vadd.f32 %v677, %v765
  %767 = vmatmul.bf16.gmra.mxu0 %v350
  %v768 = vpop.f32.mrf.mxu0
  %v769 = vadd.f32 %v680, %v768
  %v770 = vpop.f32.mrf.mxu0
  %v771 = vadd.f32 %v682, %v770
  %772 = vmatmul.bf16.gmra.mxu0 %v354
  %v773 = vpop.f32.mrf.mxu0
  %v774 = vadd.f32 %v685, %v773
  %v775 = vpop.f32.mrf.mxu0
  %v776 = vadd.f32 %v687, %v775
  %777 = vmatmul.bf16.gmra.mxu0 %v358
  %v778 = vpop.f32.mrf.mxu0
  %v779 = vadd.f32 %v690, %v778
  %v780 = vpop.f32.mrf.mxu0
  %v781 = vadd.f32 %v692, %v780
  %782 = vmatmul.bf16.gmra.mxu0 %v362
  %v783 = vpop.f32.mrf.mxu0
  %v784 = vadd.f32 %v695, %v783
  %v785 = vpop.f32.mrf.mxu0
  %v786 = vadd.f32 %v697, %v785
  %787 = vmatmul.bf16.gmra.mxu0 %v366
  %v788 = vpop.f32.mrf.mxu0
  %v789 = vadd.f32 %v700, %v788
  %v790 = vpop.f32.mrf.mxu0
  %v791 = vadd.f32 %v702, %v790
  %792 = vmatmul.bf16.gmra.mxu0 %v370
  %v793 = vpop.f32.mrf.mxu0
  %v794 = vadd.f32 %v705, %v793
  %v795 = vpop.f32.mrf.mxu0
  %v796 = vadd.f32 %v707, %v795
  %797 = vmatmul.bf16.gmra.mxu0 %v374
  %v798 = vpop.f32.mrf.mxu0
  %v799 = vadd.f32 %v710, %v798
  %v800 = vpop.f32.mrf.mxu0
  %v801 = vadd.f32 %v712, %v800
  %802 = vmatmul.bf16.gmra.mxu0 %v378
  %v803 = vpop.f32.mrf.mxu0
  %v804 = vadd.f32 %v715, %v803
  %v805 = vpop.f32.mrf.mxu0
  %v806 = vadd.f32 %v717, %v805
  %807 = vmatmul.bf16.gmra.mxu0 %v382
  %v808 = vpop.f32.mrf.mxu0
  %v809 = vadd.f32 %v720, %v808
  %v810 = vpop.f32.mrf.mxu0
  %v811 = vadd.f32 %v722, %v810
  %812 = vmatmul.bf16.gmra.mxu0 %v386
  %v813 = vpop.f32.mrf.mxu0
  %v814 = vadd.f32 %v725, %v813
  %v815 = vpop.f32.mrf.mxu0
  %v816 = vadd.f32 %v727, %v815
  %817 = vmatmul.bf16.gmra.mxu0 %v390
  %v818 = vpop.f32.mrf.mxu0
  %v819 = vadd.f32 %v730, %v818
  %v820 = vpop.f32.mrf.mxu0
  %v821 = vadd.f32 %v732, %v820
  %822 = vmatmul.bf16.gmra.mxu0 %v394
  %v823 = vpop.f32.mrf.mxu0
  %v824 = vadd.f32 %v735, %v823
  %v825 = vpop.f32.mrf.mxu0
  %v826 = vadd.f32 %v737, %v825
  %827 = vmatmul.bf16.gmra.mxu0 %v398
  %v828 = vpop.f32.mrf.mxu0
  %v829 = vadd.f32 %v740, %v828
  %v830 = vpop.f32.mrf.mxu0
  %v831 = vadd.f32 %v742, %v830
  %832 = vmatmul.bf16.gmra.mxu0 %v402
  %v833 = vpop.f32.mrf.mxu0
  %v834 = vadd.f32 %v745, %v833
  %v835 = vpop.f32.mrf.mxu0
  %v836 = vadd.f32 %v747, %v835
  %837 = vmatmul.bf16.gmra.mxu0 %v406
  %v838 = vpop.f32.mrf.mxu0
  %v839 = vadd.f32 %v750, %v838
  %v840 = vpop.f32.mrf.mxu0
  %v841 = vadd.f32 %v752, %v840
  %842 = vdwg.mxu0
  %843 = vmatpush.bf16.msra.mxu0 %v624
  %844 = vmatpush.bf16.msra.mxu0 %v623
  %845 = vmatpush.bf16.msra.mxu0 %v622
  %846 = vmatpush.bf16.msra.mxu0 %v621
  %847 = vmatpush.bf16.msra.mxu0 %v620
  %848 = vmatpush.bf16.msra.mxu0 %v619
  %849 = vmatpush.bf16.msra.mxu0 %v618
  %850 = vmatpush.bf16.msra.mxu0 %v617
  %851 = vmatmul.bf16.gmra.mxu0 %v347
  %v852 = vpop.f32.mrf.mxu0
  %v853 = vadd.f32 %v764, %v852
  %v854 = vpop.f32.mrf.mxu0
  %v855 = vadd.f32 %v766, %v854
  %856 = vmatmul.bf16.gmra.mxu0 %v351
  %v857 = vpop.f32.mrf.mxu0
  %v858 = vadd.f32 %v769, %v857
  %v859 = vpop.f32.mrf.mxu0
  %v860 = vadd.f32 %v771, %v859
  %861 = vmatmul.bf16.gmra.mxu0 %v355
  %v862 = vpop.f32.mrf.mxu0
  %v863 = vadd.f32 %v774, %v862
  %v864 = vpop.f32.mrf.mxu0
  %v865 = vadd.f32 %v776, %v864
  %866 = vmatmul.bf16.gmra.mxu0 %v359
  %v867 = vpop.f32.mrf.mxu0
  %v868 = vadd.f32 %v779, %v867
  %v869 = vpop.f32.mrf.mxu0
  %v870 = vadd.f32 %v781, %v869
  %871 = vmatmul.bf16.gmra.mxu0 %v363
  %v872 = vpop.f32.mrf.mxu0
  %v873 = vadd.f32 %v784, %v872
  %v874 = vpop.f32.mrf.mxu0
  %v875 = vadd.f32 %v786, %v874
  %876 = vmatmul.bf16.gmra.mxu0 %v367
  %v877 = vpop.f32.mrf.mxu0
  %v878 = vadd.f32 %v789, %v877
  %v879 = vpop.f32.mrf.mxu0
  %v880 = vadd.f32 %v791, %v879
  %881 = vmatmul.bf16.gmra.mxu0 %v371
  %v882 = vpop.f32.mrf.mxu0
  %v883 = vadd.f32 %v794, %v882
  %v884 = vpop.f32.mrf.mxu0
  %v885 = vadd.f32 %v796, %v884
  %886 = vmatmul.bf16.gmra.mxu0 %v375
  %v887 = vpop.f32.mrf.mxu0
  %v888 = vadd.f32 %v799, %v887
  %v889 = vpop.f32.mrf.mxu0
  %v890 = vadd.f32 %v801, %v889
  %891 = vmatmul.bf16.gmra.mxu0 %v379
  %v892 = vpop.f32.mrf.mxu0
  %v893 = vadd.f32 %v804, %v892
  %v894 = vpop.f32.mrf.mxu0
  %v895 = vadd.f32 %v806, %v894
  %896 = vmatmul.bf16.gmra.mxu0 %v383
  %v897 = vpop.f32.mrf.mxu0
  %v898 = vadd.f32 %v809, %v897
  %v899 = vpop.f32.mrf.mxu0
  %v900 = vadd.f32 %v811, %v899
  %901 = vmatmul.bf16.gmra.mxu0 %v387
  %v902 = vpop.f32.mrf.mxu0
  %v903 = vadd.f32 %v814, %v902
  %v904 = vpop.f32.mrf.mxu0
  %v905 = vadd.f32 %v816, %v904
  %906 = vmatmul.bf16.gmra.mxu0 %v391
  %v907 = vpop.f32.mrf.mxu0
  %v908 = vadd.f32 %v819, %v907
  %v909 = vpop.f32.mrf.mxu0
  %v910 = vadd.f32 %v821, %v909
  %911 = vmatmul.bf16.gmra.mxu0 %v395
  %v912 = vpop.f32.mrf.mxu0
  %v913 = vadd.f32 %v824, %v912
  %v914 = vpop.f32.mrf.mxu0
  %v915 = vadd.f32 %v826, %v914
  %916 = vmatmul.bf16.gmra.mxu0 %v399
  %v917 = vpop.f32.mrf.mxu0
  %v918 = vadd.f32 %v829, %v917
  %v919 = vpop.f32.mrf.mxu0
  %v920 = vadd.f32 %v831, %v919
  %921 = vmatmul.bf16.gmra.mxu0 %v403
  %v922 = vpop.f32.mrf.mxu0
  %v923 = vadd.f32 %v834, %v922
  %v924 = vpop.f32.mrf.mxu0
  %v925 = vadd.f32 %v836, %v924
  %926 = vmatmul.bf16.gmra.mxu0 %v407
  %v927 = vpop.f32.mrf.mxu0
  %v928 = vadd.f32 %v839, %v927
  %v929 = vpop.f32.mrf.mxu0
  %v930 = vadd.f32 %v841, %v929
  %931 = vdwg.mxu0
  %932 = vmatpush.bf16.msra.mxu0 %v632
  %933 = vmatpush.bf16.msra.mxu0 %v631
  %934 = vmatpush.bf16.msra.mxu0 %v630
  %935 = vmatpush.bf16.msra.mxu0 %v629
  %936 = vmatpush.bf16.msra.mxu0 %v628
  %937 = vmatpush.bf16.msra.mxu0 %v627
  %938 = vmatpush.bf16.msra.mxu0 %v626
  %939 = vmatpush.bf16.msra.mxu0 %v625
  %940 = vmatmul.bf16.gmra.mxu0 %v348
  %v941 = vpop.f32.mrf.mxu0
  %v942 = vadd.f32 %v853, %v941
  %v943 = vpop.f32.mrf.mxu0
  %v944 = vadd.f32 %v855, %v943
  %945 = vmatmul.bf16.gmra.mxu0 %v352
  %v946 = vpop.f32.mrf.mxu0
  %v947 = vadd.f32 %v858, %v946
  %v948 = vpop.f32.mrf.mxu0
  %v949 = vadd.f32 %v860, %v948
  %950 = vmatmul.bf16.gmra.mxu0 %v356
  %v951 = vpop.f32.mrf.mxu0
  %v952 = vadd.f32 %v863, %v951
  %v953 = vpop.f32.mrf.mxu0
  %v954 = vadd.f32 %v865, %v953
  %955 = vmatmul.bf16.gmra.mxu0 %v360
  %v956 = vpop.f32.mrf.mxu0
  %v957 = vadd.f32 %v868, %v956
  %v958 = vpop.f32.mrf.mxu0
  %v959 = vadd.f32 %v870, %v958
  %960 = vmatmul.bf16.gmra.mxu0 %v364
  %v961 = vpop.f32.mrf.mxu0
  %v962 = vadd.f32 %v873, %v961
  %v963 = vpop.f32.mrf.mxu0
  %v964 = vadd.f32 %v875, %v963
  %965 = vmatmul.bf16.gmra.mxu0 %v368
  %v966 = vpop.f32.mrf.mxu0
  %v967 = vadd.f32 %v878, %v966
  %v968 = vpop.f32.mrf.mxu0
  %v969 = vadd.f32 %v880, %v968
  %970 = vmatmul.bf16.gmra.mxu0 %v372
  %v971 = vpop.f32.mrf.mxu0
  %v972 = vadd.f32 %v883, %v971
  %v973 = vpop.f32.mrf.mxu0
  %v974 = vadd.f32 %v885, %v973
  %975 = vmatmul.bf16.gmra.mxu0 %v376
  %v976 = vpop.f32.mrf.mxu0
  %v977 = vadd.f32 %v888, %v976
  %v978 = vpop.f32.mrf.mxu0
  %v979 = vadd.f32 %v890, %v978
  %980 = vmatmul.bf16.gmra.mxu0 %v380
  %v981 = vpop.f32.mrf.mxu0
  %v982 = vadd.f32 %v893, %v981
  %v983 = vpop.f32.mrf.mxu0
  %v984 = vadd.f32 %v895, %v983
  %985 = vmatmul.bf16.gmra.mxu0 %v384
  %v986 = vpop.f32.mrf.mxu0
  %v987 = vadd.f32 %v898, %v986
  %v988 = vpop.f32.mrf.mxu0
  %v989 = vadd.f32 %v900, %v988
  %990 = vmatmul.bf16.gmra.mxu0 %v388
  %v991 = vpop.f32.mrf.mxu0
  %v992 = vadd.f32 %v903, %v991
  %v993 = vpop.f32.mrf.mxu0
  %v994 = vadd.f32 %v905, %v993
  %995 = vmatmul.bf16.gmra.mxu0 %v392
  %v996 = vpop.f32.mrf.mxu0
  %v997 = vadd.f32 %v908, %v996
  %v998 = vpop.f32.mrf.mxu0
  %v999 = vadd.f32 %v910, %v998
  %1000 = vmatmul.bf16.gmra.mxu0 %v396
  %v1001 = vpop.f32.mrf.mxu0
  %v1002 = vadd.f32 %v913, %v1001
  %v1003 = vpop.f32.mrf.mxu0
  %v1004 = vadd.f32 %v915, %v1003
  %1005 = vmatmul.bf16.gmra.mxu0 %v400
  %v1006 = vpop.f32.mrf.mxu0
  %v1007 = vadd.f32 %v918, %v1006
  %v1008 = vpop.f32.mrf.mxu0
  %v1009 = vadd.f32 %v920, %v1008
  %1010 = vmatmul.bf16.gmra.mxu0 %v404
  %v1011 = vpop.f32.mrf.mxu0
  %v1012 = vadd.f32 %v923, %v1011
  %v1013 = vpop.f32.mrf.mxu0
  %v1014 = vadd.f32 %v925, %v1013
  %1015 = vmatmul.bf16.gmra.mxu0 %v408
  %v1016 = vpop.f32.mrf.mxu0
  %v1017 = vadd.f32 %v928, %v1016
  %v1018 = vpop.f32.mrf.mxu0
  %v1019 = vadd.f32 %v930, %v1018
  %1020 = vdwg.mxu0
  %v1021 = vmax.f32 %v942, 0.0
  %v1022 = vmax.f32 %v944, 0.0
  %v1023 = vmax.f32 %v947, 0.0
  %v1024 = vmax.f32 %v949, 0.0
  %v1025 = vmax.f32 %v952, 0.0
  %v1026 = vmax.f32 %v954, 0.0
  %v1027 = vmax.f32 %v957, 0.0
  %v1028 = vmax.f32 %v959, 0.0
  %v1029 = vmax.f32 %v962, 0.0
  %v1030 = vmax.f32 %v964, 0.0
  %v1031 = vmax.f32 %v967, 0.0
  %v1032 = vmax.f32 %v969, 0.0
  %v1033 = vmax.f32 %v972, 0.0
  %v1034 = vmax.f32 %v974, 0.0
  %v1035 = vmax.f32 %v977, 0.0
  %v1036 = vmax.f32 %v979, 0.0
  %v1037 = vmax.f32 %v982, 0.0
  %v1038 = vmax.f32 %v984, 0.0
  %v1039 = vmax.f32 %v987, 0.0
  %v1040 = vmax.f32 %v989, 0.0
  %v1041 = vmax.f32 %v992, 0.0
  %v1042 = vmax.f32 %v994, 0.0
  %v1043 = vmax.f32 %v997, 0.0
  %v1044 = vmax.f32 %v999, 0.0
  %v1045 = vmax.f32 %v1002, 0.0
  %v1046 = vmax.f32 %v1004, 0.0
  %v1047 = vmax.f32 %v1007, 0.0
  %v1048 = vmax.f32 %v1009, 0.0
  %v1049 = vmax.f32 %v1012, 0.0
  %v1050 = vmax.f32 %v1014, 0.0
  %v1051 = vmax.f32 %v1017, 0.0
  %v1052 = vmax.f32 %v1019, 0.0
  %1053 = vxpose.xlu0.b32.start [1/16] %v1021, 128
  %1054 = vxpose.xlu0.b32.cont [2/16] %v1022, 128
  %1055 = vxpose.xlu0.b32.cont [3/16] %v1023, 128
  %1056 = vxpose.xlu0.b32.cont [4/16] %v1024, 128
  %1057 = vxpose.xlu0.b32.cont [5/16] %v1025, 128
  %1058 = vxpose.xlu0.b32.cont [6/16] %v1026, 128
  %1059 = vxpose.xlu0.b32.cont [7/16] %v1027, 128
  %1060 = vxpose.xlu0.b32.cont [8/16] %v1028, 128
  %1061 = vxpose.xlu0.b32.cont [9/16] %v1029, 128
  %1062 = vxpose.xlu0.b32.cont [10/16] %v1030, 128
  %1063 = vxpose.xlu0.b32.cont [11/16] %v1031, 128
  %1064 = vxpose.xlu0.b32.cont [12/16] %v1032, 128
  %1065 = vxpose.xlu0.b32.cont [13/16] %v1033, 128
  %1066 = vxpose.xlu0.b32.cont [14/16] %v1034, 128
  %1067 = vxpose.xlu0.b32.cont [15/16] %v1035, 128
  %1068 = vxpose.xlu0.b32.end [16/16] %v1036, 128
  %v1069 = vpop.trf.xlu0
  %v1070 = vpop.trf.xlu0
  %v1071 = vpop.trf.xlu0
  %v1072 = vpop.trf.xlu0
  %v1073 = vpop.trf.xlu0
  %v1074 = vpop.trf.xlu0
  %v1075 = vpop.trf.xlu0
  %v1076 = vpop.trf.xlu0
  %v1077 = vpop.trf.xlu0
  %v1078 = vpop.trf.xlu0
  %v1079 = vpop.trf.xlu0
  %v1080 = vpop.trf.xlu0
  %v1081 = vpop.trf.xlu0
  %v1082 = vpop.trf.xlu0
  %v1083 = vpop.trf.xlu0
  %v1084 = vpop.trf.xlu0
  %1085 = vxpose.xlu0.b32.start [1/16] %v1037, 128
  %1086 = vxpose.xlu0.b32.cont [2/16] %v1038, 128
  %1087 = vxpose.xlu0.b32.cont [3/16] %v1039, 128
  %1088 = vxpose.xlu0.b32.cont [4/16] %v1040, 128
  %1089 = vxpose.xlu0.b32.cont [5/16] %v1041, 128
  %1090 = vxpose.xlu0.b32.cont [6/16] %v1042, 128
  %1091 = vxpose.xlu0.b32.cont [7/16] %v1043, 128
  %1092 = vxpose.xlu0.b32.cont [8/16] %v1044, 128
  %1093 = vxpose.xlu0.b32.cont [9/16] %v1045, 128
  %1094 = vxpose.xlu0.b32.cont [10/16] %v1046, 128
  %1095 = vxpose.xlu0.b32.cont [11/16] %v1047, 128
  %1096 = vxpose.xlu0.b32.cont [12/16] %v1048, 128
  %1097 = vxpose.xlu0.b32.cont [13/16] %v1049, 128
  %1098 = vxpose.xlu0.b32.cont [14/16] %v1050, 128
  %1099 = vxpose.xlu0.b32.cont [15/16] %v1051, 128
  %1100 = vxpose.xlu0.b32.end [16/16] %v1052, 128
  %v1101 = vpop.trf.xlu0
  %v1102 = vpop.trf.xlu0
  %v1103 = vpop.trf.xlu0
  %v1104 = vpop.trf.xlu0
  %v1105 = vpop.trf.xlu0
  %v1106 = vpop.trf.xlu0
  %v1107 = vpop.trf.xlu0
  %v1108 = vpop.trf.xlu0
  %v1109 = vpop.trf.xlu0
  %v1110 = vpop.trf.xlu0
  %v1111 = vpop.trf.xlu0
  %v1112 = vpop.trf.xlu0
  %v1113 = vpop.trf.xlu0
  %v1114 = vpop.trf.xlu0
  %v1115 = vpop.trf.xlu0
  %v1116 = vpop.trf.xlu0
  %v1117 = vld [vmem:[%s3] sm:$0xff]
  %v1118 = vld [vmem:[%s3 + $0x8] sm:$0xff]
  %v1119 = vld [vmem:[%s3 + $0x10] sm:$0xff]
  %v1120 = vld [vmem:[%s3 + $0x18] sm:$0xff]
  %v1121 = vld [vmem:[%s3 + $0x20] sm:$0xff]
  %v1122 = vld [vmem:[%s3 + $0x28] sm:$0xff]
  %v1123 = vld [vmem:[%s3 + $0x30] sm:$0xff]
  %v1124 = vld [vmem:[%s3 + $0x38] sm:$0xff]
  %v1125 = vld [vmem:[%s3 + $0x40] sm:$0xff]
  %v1126 = vld [vmem:[%s3 + $0x48] sm:$0xff]
  %v1127 = vld [vmem:[%s3 + $0x50] sm:$0xff]
  %v1128 = vld [vmem:[%s3 + $0x58] sm:$0xff]
  %v1129 = vld [vmem:[%s3 + $0x60] sm:$0xff]
  %v1130 = vld [vmem:[%s3 + $0x68] sm:$0xff]
  %v1131 = vld [vmem:[%s3 + $0x70] sm:$0xff]
  %v1132 = vld [vmem:[%s3 + $0x78] sm:$0xff]
  %1134 = vset.pattern.permute.xlu0 0
  %1135 = vperm.xlu0 %1134, %v1117
  %v1136 = vpop.permute.xlu0 %1135
  %1139 = vset.pattern.permute.xlu0 0
  %1140 = vperm.xlu0 %1139, %v1118
  %v1141 = vpop.permute.xlu0 %1140
  %1144 = vset.pattern.permute.xlu0 0
  %1145 = vperm.xlu0 %1144, %v1119
  %v1146 = vpop.permute.xlu0 %1145
  %1149 = vset.pattern.permute.xlu0 0
  %1150 = vperm.xlu0 %1149, %v1120
  %v1151 = vpop.permute.xlu0 %1150
  %1154 = vset.pattern.permute.xlu0 0
  %1155 = vperm.xlu0 %1154, %v1121
  %v1156 = vpop.permute.xlu0 %1155
  %1159 = vset.pattern.permute.xlu0 0
  %1160 = vperm.xlu0 %1159, %v1122
  %v1161 = vpop.permute.xlu0 %1160
  %1164 = vset.pattern.permute.xlu0 0
  %1165 = vperm.xlu0 %1164, %v1123
  %v1166 = vpop.permute.xlu0 %1165
  %1169 = vset.pattern.permute.xlu0 0
  %1170 = vperm.xlu0 %1169, %v1124
  %v1171 = vpop.permute.xlu0 %1170
  %1174 = vset.pattern.permute.xlu0 0
  %1175 = vperm.xlu0 %1174, %v1125
  %v1176 = vpop.permute.xlu0 %1175
  %1179 = vset.pattern.permute.xlu0 0
  %1180 = vperm.xlu0 %1179, %v1126
  %v1181 = vpop.permute.xlu0 %1180
  %1184 = vset.pattern.permute.xlu0 0
  %1185 = vperm.xlu0 %1184, %v1127
  %v1186 = vpop.permute.xlu0 %1185
  %1189 = vset.pattern.permute.xlu0 0
  %1190 = vperm.xlu0 %1189, %v1128
  %v1191 = vpop.permute.xlu0 %1190
  %1194 = vset.pattern.permute.xlu0 0
  %1195 = vperm.xlu0 %1194, %v1129
  %v1196 = vpop.permute.xlu0 %1195
  %1199 = vset.pattern.permute.xlu0 0
  %1200 = vperm.xlu0 %1199, %v1130
  %v1201 = vpop.permute.xlu0 %1200
  %1204 = vset.pattern.permute.xlu0 0
  %1205 = vperm.xlu0 %1204, %v1131
  %v1206 = vpop.permute.xlu0 %1205
  %1209 = vset.pattern.permute.xlu0 0
  %1210 = vperm.xlu0 %1209, %v1132
  %v1211 = vpop.permute.xlu0 %1210
  %v1213 = vmul.f32 %v1069, %v1136
  %v1214 = vmul.f32 %v1101, %v1136
  %v1215 = vmul.f32 %v1070, %v1141
  %v1216 = vmul.f32 %v1102, %v1141
  %v1217 = vmul.f32 %v1071, %v1146
  %v1218 = vmul.f32 %v1103, %v1146
  %v1219 = vmul.f32 %v1072, %v1151
  %v1220 = vmul.f32 %v1104, %v1151
  %v1221 = vmul.f32 %v1073, %v1156
  %v1222 = vmul.f32 %v1105, %v1156
  %v1223 = vmul.f32 %v1074, %v1161
  %v1224 = vmul.f32 %v1106, %v1161
  %v1225 = vmul.f32 %v1075, %v1166
  %v1226 = vmul.f32 %v1107, %v1166
  %v1227 = vmul.f32 %v1076, %v1171
  %v1228 = vmul.f32 %v1108, %v1171
  %v1229 = vmul.f32 %v1077, %v1176
  %v1230 = vmul.f32 %v1109, %v1176
  %v1231 = vmul.f32 %v1078, %v1181
  %v1232 = vmul.f32 %v1110, %v1181
  %v1233 = vmul.f32 %v1079, %v1186
  %v1234 = vmul.f32 %v1111, %v1186
  %v1235 = vmul.f32 %v1080, %v1191
  %v1236 = vmul.f32 %v1112, %v1191
  %v1237 = vmul.f32 %v1081, %v1196
  %v1238 = vmul.f32 %v1113, %v1196
  %v1239 = vmul.f32 %v1082, %v1201
  %v1240 = vmul.f32 %v1114, %v1201
  %v1241 = vmul.f32 %v1083, %v1206
  %v1242 = vmul.f32 %v1115, %v1206
  %v1243 = vmul.f32 %v1084, %v1211
  %v1244 = vmul.f32 %v1116, %v1211
  %v1245 = vadd.f32 %v1213, %v1215
  %v1246 = vadd.f32 %v1245, %v1217
  %v1247 = vadd.f32 %v1246, %v1219
  %v1248 = vadd.f32 %v1247, %v1221
  %v1249 = vadd.f32 %v1248, %v1223
  %v1250 = vadd.f32 %v1249, %v1225
  %v1251 = vadd.f32 %v1250, %v1227
  %v1252 = vadd.f32 %v1251, %v1229
  %v1253 = vadd.f32 %v1252, %v1231
  %v1254 = vadd.f32 %v1253, %v1233
  %v1255 = vadd.f32 %v1254, %v1235
  %v1256 = vadd.f32 %v1255, %v1237
  %v1257 = vadd.f32 %v1256, %v1239
  %v1258 = vadd.f32 %v1257, %v1241
  %v1259 = vadd.f32 %v1258, %v1243
  %v1260 = vrot.slane %v1259, 4
  %v1261 = vadd.f32 %v1259, %v1260
  %v1262 = vrot.slane %v1261, 2
  %v1263 = vadd.f32 %v1261, %v1262
  %v1264 = vrot.slane %v1263, 1
  %v1265 = vadd.f32 %v1263, %v1264
  %v1266 = vadd.f32 %v1214, %v1216
  %v1267 = vadd.f32 %v1266, %v1218
  %v1268 = vadd.f32 %v1267, %v1220
  %v1269 = vadd.f32 %v1268, %v1222
  %v1270 = vadd.f32 %v1269, %v1224
  %v1271 = vadd.f32 %v1270, %v1226
  %v1272 = vadd.f32 %v1271, %v1228
  %v1273 = vadd.f32 %v1272, %v1230
  %v1274 = vadd.f32 %v1273, %v1232
  %v1275 = vadd.f32 %v1274, %v1234
  %v1276 = vadd.f32 %v1275, %v1236
  %v1277 = vadd.f32 %v1276, %v1238
  %v1278 = vadd.f32 %v1277, %v1240
  %v1279 = vadd.f32 %v1278, %v1242
  %v1280 = vadd.f32 %v1279, %v1244
  %v1281 = vrot.slane %v1280, 4
  %v1282 = vadd.f32 %v1280, %v1281
  %v1283 = vrot.slane %v1282, 2
  %v1284 = vadd.f32 %v1282, %v1283
  %v1285 = vrot.slane %v1284, 1
  %v1286 = vadd.f32 %v1284, %v1285
  %s1287 = sld [smem:[#allocation2]]
  %v1288 = vstv %s1287
  %v1289 = vadd.f32 %v1265, %v1288
  %v1290 = vadd.f32 %v1286, %v1288
  %v1291 = vxor.u32 %v1289, 2147483648
  %v1292 = vxor.u32 %v1290, 2147483648
  %v1293 = vmul.f32 %v1291, 1.442695
  %v1294 = vpow.pop %v1293
  %v1295 = vmul.f32 %v1292, 1.442695
  %v1296 = vpow.pop %v1295
  %v1297 = vadd.f32 %v1294, 1.0
  %v1298 = vadd.f32 %v1296, 1.0
  %v1299 = vrcp.pop %v1297
  %v1300 = vmul.f32 %v1297, %v1299
  %v1301 = vsub.f32 1.0, %v1300
  %v1302 = vmul.f32 %v1299, %v1301
  %v1303 = vadd.f32 %v1299, %v1302
  %vm1304 = vweird.f32 %v1297
  %vm1305 = vweird.f32 %v1299
  %vm1306 = vmor %vm1304, %vm1305
  %v1307 = vsel %vm1306, %v1299, %v1303
  %v1308 = vand.u32 2147483647, %v1297
  %vm1309 = vcmp.eq.f32.partialorder %v1308, 8.507059e+37
  %v1310 = vand.u32 %v1297, 2147483648
  %v1311 = vor.u32 1.1754944e-38, %v1310
  %v1312 = vsel %vm1309, %v1311, %v1307
  %v1313 = vmul.f32 1.0, %v1312
  %v1314 = vrcp.pop %v1298
  %v1315 = vmul.f32 %v1298, %v1314
  %v1316 = vsub.f32 1.0, %v1315
  %v1317 = vmul.f32 %v1314, %v1316
  %v1318 = vadd.f32 %v1314, %v1317
  %vm1319 = vweird.f32 %v1298
  %vm1320 = vweird.f32 %v1314
  %vm1321 = vmor %vm1319, %vm1320
  %v1322 = vsel %vm1321, %v1314, %v1318
  %v1323 = vand.u32 2147483647, %v1298
  %vm1324 = vcmp.eq.f32.partialorder %v1323, 8.507059e+37
  %v1325 = vand.u32 %v1298, 2147483648
  %v1326 = vor.u32 1.1754944e-38, %v1325
  %v1327 = vsel %vm1324, %v1326, %v1322
  %v1328 = vmul.f32 1.0, %v1327
  %v1331 = vrot.slane %v1328, 7
  %vm1332 = vcmask 1040384
  %v1333 = vsel %vm1332, %v1313, %v1331
  %v1335 = vlaneseq
  %vm1336 = vcmp.ge.s32.totalorder %v1335, 0
  %vm1337 = vcmp.lt.s32.totalorder %v1335, 256
  %vm1338 = vmand %vm1336, %vm1337
  %1339 = vst.msk [vmem:[%s5] sm:$0x3] %vm1338, %v1333
  // Predicated region
  $region22: #{meta_learner_forward.1} parent=0 // pred_check
    _
  $region23: #{meta_learner_forward.1} parent=0 // pred_check_branch
    %1341 = sbr.rel (0) target = $region25
  $region24: #{meta_learner_forward.1} parent=0 // pred_region
    _
  $region25: #{meta_learner_forward.1} parent=0 // pred_fallthru
    _
  // Predicated region
  $region26: #{meta_learner_forward.1} parent=0 // pred_check
    _
  $region27: #{meta_learner_forward.1} parent=0 // pred_check_branch
    %1343 = sbr.rel (0) target = $region29
  $region28: #{meta_learner_forward.1} parent=0 // pred_region
    _
  $region29: #{meta_learner_forward.1} parent=0 // pred_fallthru
    _

</llo_original>
